<compile_context>
chip_gen: v6e
topology: v6e:2x2x1
jax: 0.10.0
libtpu: 0.0.40
codegen_flags: <defaults>
</compile_context>

<pallas_src>
import jax
import jax.numpy as jnp
from jax.experimental import pallas as pl
from jax.experimental.pallas import tpu as pltpu

KERNEL_SIZE = 11
PAD = (KERNEL_SIZE - 1) // 2

# ~4 MiB per x block => ~8 MiB double-buffered, fits every generation's
# scoped-VMEM default with room for the output block, scratch and matrices.
_TARGET_BLOCK_BYTES = 4 * 1024 * 1024


def _spatial_attention_kernel(x_ref, m_avg_ref, m_max_ref, o_ref,
                              sum_acc, max_acc):
    # x_ref:     VMEM (1, TC, TH, W) input tile
    # m_avg_ref: VMEM (W, W) Toeplitz conv matrix for the mean channel (1/C folded in)
    # m_max_ref: VMEM (W, W) Toeplitz conv matrix for the max channel
    # o_ref:     VMEM (1, 1, TH, W) output tile (resident across the C axis)
    # sum_acc / max_acc: VMEM (TH, W) f32 running channel sum / max
    c = pl.program_id(2)

    @pl.when(c == 0)
    def _init():
        sum_acc[...] = jnp.zeros_like(sum_acc)
        max_acc[...] = jnp.full_like(max_acc, -jnp.inf)

    x = x_ref[0].astype(jnp.float32)                 # (TC, TH, W), f32 accumulation
    sum_acc[...] = sum_acc[...] + jnp.sum(x, axis=0)
    max_acc[...] = jnp.maximum(max_acc[...], jnp.max(x, axis=0))

    @pl.when(c == pl.num_programs(2) - 1)
    def _finalize():
        # 1/C is folded into m_avg, so sum_acc @ m_avg is the mean-channel conv.
        conv = jnp.dot(sum_acc[...], m_avg_ref[...],
                       preferred_element_type=jnp.float32,
                       precision=jax.lax.Precision.HIGHEST)
        conv = conv + jnp.dot(max_acc[...], m_max_ref[...],
                              preferred_element_type=jnp.float32,
                              precision=jax.lax.Precision.HIGHEST)
        o_ref[0, 0] = jax.nn.sigmoid(conv).astype(o_ref.dtype)


def _choose_tiles(C, H, W, itemsize):
    """Pick (TC, TH): divisors of C / H keeping an x block near the target size.

    TH is either full H (always legal under the (8,128) rule) or a multiple
    of 8 dividing H; TC is any divisor of C (it is not a minor dim).
    """
    th = H
    if H * W * itemsize > _TARGET_BLOCK_BYTES:
        cands = [d for d in range(8, H + 1, 8)
                 if H % d == 0 and d * W * itemsize <= _TARGET_BLOCK_BYTES]
        if cands:
            th = max(cands)
    row_bytes = th * W * itemsize
    cands = [d for d in range(1, C + 1)
             if C % d == 0 and d * row_bytes <= _TARGET_BLOCK_BYTES]
    tc = max(cands) if cands else 1
    return tc, th


def spatial_attention(x, weight):
    """x: (N, C, H, W); weight: (1, 2, 1, KERNEL_SIZE) PyTorch OIHW conv weight."""
    N, C, H, W = x.shape

    # Banded Toeplitz matrices: y[h, w] = sum_j in[h, j] * taps[j - w + PAD]
    # (cross-correlation with zero padding), so the 1x11 conv becomes an MXU
    # matmul along the width axis.  The mean's 1/C is folded into m_avg.
    w2 = weight.reshape(2, KERNEL_SIZE).astype(jnp.float32)
    idx = jnp.arange(W)
    tap = idx[:, None] - idx[None, :] + PAD           # (W_in, W_out)
    valid = (tap >= 0) & (tap < KERNEL_SIZE)
    tap = jnp.clip(tap, 0, KERNEL_SIZE - 1)
    m_avg = jnp.where(valid, w2[0][tap], 0.0) * (1.0 / C)
    m_max = jnp.where(valid, w2[1][tap], 0.0)

    tc, th = _choose_tiles(C, H, W, jnp.dtype(x.dtype).itemsize)
    grid = (N, H // th, C // tc)

    return pl.pallas_call(
        _spatial_attention_kernel,
        out_shape=jax.ShapeDtypeStruct((N, 1, H, W), x.dtype),
        grid_spec=pltpu.PrefetchScalarGridSpec(
            num_scalar_prefetch=0,
            grid=grid,
            in_specs=[
                pl.BlockSpec((1, tc, th, W), lambda n, h, c: (n, c, h, 0)),
                pl.BlockSpec((W, W), lambda n, h, c: (0, 0)),
                pl.BlockSpec((W, W), lambda n, h, c: (0, 0)),
            ],
            out_specs=pl.BlockSpec((1, 1, th, W), lambda n, h, c: (n, 0, h, 0)),
            scratch_shapes=[
                pltpu.VMEM((th, W), jnp.float32),   # running channel sum
                pltpu.VMEM((th, W), jnp.float32),   # running channel max
            ],
        ),
        compiler_params=pltpu.CompilerParams(
            dimension_semantics=("parallel", "parallel", "arbitrary"),
            vmem_limit_bytes=32 * 1024 * 1024,
        ),
    )(x, m_avg, m_max)


def spatial_attention_reference(x, weight):
    xf = x.astype(jnp.float32)
    avg = jnp.mean(xf, axis=1, keepdims=True)
    mx = jnp.max(xf, axis=1, keepdims=True)
    cat = jnp.concatenate([avg, mx], axis=1)
    y = jax.lax.conv_general_dilated(
        cat, weight.astype(jnp.float32), window_strides=(1, 1),
        padding=((0, 0), (PAD, PAD)),
        dimension_numbers=("NCHW", "OIHW", "NCHW"),
        precision=jax.lax.Precision.HIGHEST)
    return jax.nn.sigmoid(y).astype(x.dtype)


if __name__ == "__main__":
    key = jax.random.PRNGKey(0)
    kx, kw = jax.random.split(key)

    # small NCHW input consistent with the module's forward
    x = jax.random.normal(kx, (2, 4, 16, 16), dtype=jnp.float32)
    # synthetic Conv2d(2, 1, (1, 11), bias=False) weight in OIHW: (1, 2, 1, 11)
    weight = 0.1 * jax.random.normal(kw, (1, 2, 1, KERNEL_SIZE), dtype=jnp.float32)

    out = jax.block_until_ready(spatial_attention(x, weight))
    ref = spatial_attention_reference(x, weight)

    assert out.shape == (2, 1, 16, 16)
    assert jnp.allclose(out, ref, atol=1e-5, rtol=1e-5), \
        float(jnp.max(jnp.abs(out - ref)))

    print("KERNEL_OK")
</pallas_src>

<mosaic_0001>
module attributes {stable_mosaic.version = 11 : i64} {
  func.func @_spatial_attention_kernel(%arg0: i32, %arg1: i32, %arg2: i32, %arg3: memref<1x4x16x16xf32, #tpu.memory_space<vmem>>, %arg4: memref<16x16xf32, #tpu.memory_space<vmem>>, %arg5: memref<16x16xf32, #tpu.memory_space<vmem>>, %arg6: memref<1x1x16x16xf32, #tpu.memory_space<vmem>>, %arg7: memref<16x16xf32, #tpu.memory_space<vmem>>, %arg8: memref<16x16xf32, #tpu.memory_space<vmem>>) attributes {dimension_semantics = [#tpu.dimension_semantics<parallel>, #tpu.dimension_semantics<parallel>, #tpu.dimension_semantics<arbitrary>], iteration_bounds = array<i64: 2, 1, 1>, scalar_prefetch = 0 : i64, scratch_operands = 2 : i64, tpu.core_type = #tpu.core_type<tc>, window_params = [{transform_indices = @transform_0, window_bounds = array<i64: 1, 4, 16, 16>}, {pipeline_mode = #tpu.pipeline_mode<synchronous>, transform_indices = @transform_1, window_bounds = array<i64: 16, 16>}, {pipeline_mode = #tpu.pipeline_mode<synchronous>, transform_indices = @transform_2, window_bounds = array<i64: 16, 16>}, {transform_indices = @transform_3, window_bounds = array<i64: 1, 1, 16, 16>}]} {
    %c0_i32 = arith.constant 0 : i32
    %0 = arith.cmpi eq, %arg2, %c0_i32 : i32
    %1 = arith.extui %0 : i1 to i32
    %c0_i32_0 = arith.constant 0 : i32
    %2 = arith.cmpi ne, %1, %c0_i32_0 : i32
    scf.if %2 {
      %cst_15 = arith.constant 0.000000e+00 : f32
      %16 = vector.broadcast %cst_15 : f32 to vector<16x16xf32>
      %c0_16 = arith.constant 0 : index
      %c0_17 = arith.constant 0 : index
      %17 = vector.load %arg7[%c0_16, %c0_17] : memref<16x16xf32, #tpu.memory_space<vmem>>, vector<16x16xf32>
      tpu.vector_store %arg7[%c0_16, %c0_17], %16 {strides = array<i32>} : memref<16x16xf32, #tpu.memory_space<vmem>>, vector<16x16xf32>,
      %cst_18 = arith.constant 0xFF800000 : f32
      %18 = vector.broadcast %cst_18 : f32 to vector<16x16xf32>
      %c0_19 = arith.constant 0 : index
      %c0_20 = arith.constant 0 : index
      %19 = vector.load %arg8[%c0_19, %c0_20] : memref<16x16xf32, #tpu.memory_space<vmem>>, vector<16x16xf32>
      tpu.vector_store %arg8[%c0_19, %c0_20], %18 {strides = array<i32>} : memref<16x16xf32, #tpu.memory_space<vmem>>, vector<16x16xf32>,
    } else {
    }
    %c0 = arith.constant 0 : index
    %c0_1 = arith.constant 0 : index
    %c0_2 = arith.constant 0 : index
    %c0_3 = arith.constant 0 : index
    %3 = vector.load %arg3[%c0, %c0_1, %c0_2, %c0_3] : memref<1x4x16x16xf32, #tpu.memory_space<vmem>>, vector<1x4x16x16xf32>
    %4 = vector.shape_cast %3 : vector<1x4x16x16xf32> to vector<4x16x16xf32>
    %c0_4 = arith.constant 0 : index
    %c0_5 = arith.constant 0 : index
    %5 = vector.load %arg7[%c0_4, %c0_5] : memref<16x16xf32, #tpu.memory_space<vmem>>, vector<16x16xf32>
    %cst = arith.constant dense<0.000000e+00> : vector<16x16xf32>
    %6 = vector.multi_reduction <add>, %4, %cst [0] : vector<4x16x16xf32> to vector<16x16xf32>
    %7 = arith.addf %5, %6 : vector<16x16xf32>
    %c0_6 = arith.constant 0 : index
    %c0_7 = arith.constant 0 : index
    %8 = vector.load %arg7[%c0_6, %c0_7] : memref<16x16xf32, #tpu.memory_space<vmem>>, vector<16x16xf32>
    tpu.vector_store %arg7[%c0_6, %c0_7], %7 {strides = array<i32>} : memref<16x16xf32, #tpu.memory_space<vmem>>, vector<16x16xf32>,
    %c0_8 = arith.constant 0 : index
    %c0_9 = arith.constant 0 : index
    %9 = vector.load %arg8[%c0_8, %c0_9] : memref<16x16xf32, #tpu.memory_space<vmem>>, vector<16x16xf32>
    %cst_10 = arith.constant dense<0xFF800000> : vector<16x16xf32>
    %10 = vector.multi_reduction <maximumf>, %4, %cst_10 [0] : vector<4x16x16xf32> to vector<16x16xf32>
    %11 = arith.maximumf %9, %10 : vector<16x16xf32>
    %c0_11 = arith.constant 0 : index
    %c0_12 = arith.constant 0 : index
    %12 = vector.load %arg8[%c0_11, %c0_12] : memref<16x16xf32, #tpu.memory_space<vmem>>, vector<16x16xf32>
    tpu.vector_store %arg8[%c0_11, %c0_12], %11 {strides = array<i32>} : memref<16x16xf32, #tpu.memory_space<vmem>>, vector<16x16xf32>,
    %c0_i32_13 = arith.constant 0 : i32
    %13 = arith.cmpi eq, %arg2, %c0_i32_13 : i32
    %14 = arith.extui %13 : i1 to i32
    %c0_i32_14 = arith.constant 0 : i32
    %15 = arith.cmpi ne, %14, %c0_i32_14 : i32
    scf.if %15 {
      %c0_15 = arith.constant 0 : index
      %c0_16 = arith.constant 0 : index
      %16 = vector.load %arg7[%c0_15, %c0_16] : memref<16x16xf32, #tpu.memory_space<vmem>>, vector<16x16xf32>
      %c0_17 = arith.constant 0 : index
      %c0_18 = arith.constant 0 : index
      %17 = vector.load %arg4[%c0_17, %c0_18] : memref<16x16xf32, #tpu.memory_space<vmem>>, vector<16x16xf32>
      %cst_19 = arith.constant dense<0.000000e+00> : vector<16x16xf32>
      %18 = tpu.matmul %16, %17, %cst_19 {dimension_numbers = #tpu.dot_dimension_numbers<[1], [0], [0], [1], [0, 0, 1, 1], [], []>, precision = #tpu.contract_precision<fp32>} : vector<16x16xf32>, vector<16x16xf32>, vector<16x16xf32> -> vector<16x16xf32>
      %c0_20 = arith.constant 0 : index
      %c0_21 = arith.constant 0 : index
      %19 = vector.load %arg8[%c0_20, %c0_21] : memref<16x16xf32, #tpu.memory_space<vmem>>, vector<16x16xf32>
      %c0_22 = arith.constant 0 : index
      %c0_23 = arith.constant 0 : index
      %20 = vector.load %arg5[%c0_22, %c0_23] : memref<16x16xf32, #tpu.memory_space<vmem>>, vector<16x16xf32>
      %cst_24 = arith.constant dense<0.000000e+00> : vector<16x16xf32>
      %21 = tpu.matmul %19, %20, %cst_24 {dimension_numbers = #tpu.dot_dimension_numbers<[1], [0], [0], [1], [0, 0, 1, 1], [], []>, precision = #tpu.contract_precision<fp32>} : vector<16x16xf32>, vector<16x16xf32>, vector<16x16xf32> -> vector<16x16xf32>
      %22 = arith.addf %18, %21 : vector<16x16xf32>
      %23 = arith.negf %22 : vector<16x16xf32>
      %24 = math.exp %23 : vector<16x16xf32>
      %cst_25 = arith.constant 1.000000e+00 : f32
      %25 = vector.broadcast %cst_25 : f32 to vector<16x16xf32>
      %26 = arith.addf %25, %24 : vector<16x16xf32>
      %27 = arith.divf %25, %26 : vector<16x16xf32>
      %c0_26 = arith.constant 0 : index
      %c0_27 = arith.constant 0 : index
      %c0_28 = arith.constant 0 : index
      %c0_29 = arith.constant 0 : index
      %28 = vector.load %arg6[%c0_26, %c0_27, %c0_28, %c0_29] : memref<1x1x16x16xf32, #tpu.memory_space<vmem>>, vector<1x1x16x16xf32>
      %29 = vector.shape_cast %28 : vector<1x1x16x16xf32> to vector<16x16xf32>
      %30 = vector.shape_cast %27 : vector<16x16xf32> to vector<1x1x16x16xf32>
      tpu.vector_store %arg6[%c0_26, %c0_27, %c0_28, %c0_29], %30 {strides = array<i32>} : memref<1x1x16x16xf32, #tpu.memory_space<vmem>>, vector<1x1x16x16xf32>,
    } else {
    }
    return
  }
  func.func @transform_0(%arg0: i32, %arg1: i32, %arg2: i32) -> (i32, i32, i32, i32) {
    %c0_i32 = arith.constant 0 : i32
    %c0_i32_0 = arith.constant 0 : i32
    return %arg0, %arg2, %arg1, %c0_i32 : i32, i32, i32, i32
  }
  func.func @transform_1(%arg0: i32, %arg1: i32, %arg2: i32) -> (i32, i32) {
    %c0_i32 = arith.constant 0 : i32
    %c0_i32_0 = arith.constant 0 : i32
    %c0_i32_1 = arith.constant 0 : i32
    return %c0_i32, %c0_i32_0 : i32, i32
  }
  func.func @transform_2(%arg0: i32, %arg1: i32, %arg2: i32) -> (i32, i32) {
    %c0_i32 = arith.constant 0 : i32
    %c0_i32_0 = arith.constant 0 : i32
    %c0_i32_1 = arith.constant 0 : i32
    return %c0_i32, %c0_i32_0 : i32, i32
  }
  func.func @transform_3(%arg0: i32, %arg1: i32, %arg2: i32) -> (i32, i32, i32, i32) {
    %c0_i32 = arith.constant 0 : i32
    %c0_i32_0 = arith.constant 0 : i32
    %c0_i32_1 = arith.constant 0 : i32
    return %arg0, %c0_i32, %arg1, %c0_i32_0 : i32, i32, i32, i32
  }
}

</mosaic_0001>

<llo_original>
// kernel: tpu_custom_call.1
$region0: #{tpu_custom_call.1}
  #allocation0 [shape = 'u32[]', space=smem, size = 0x4, offset = 0x4, fixed_abs, tag = 'smem constant byte address 0x4 - core index']
  #allocation1 [shape = 'u32[144,128]{1,0:T(1,128)}', space=vmem, size = 0x12000, scoped, tag = 'internal scratch']
  #allocation2 [shape = 'f32[16,16]{1,0:T(8,128)}', space=vmem, size = 0x2000, scoped, tag = 'scratch operand']
  #allocation3 [shape = 'f32[16,16]{1,0:T(8,128)}', space=vmem, size = 0x2000, scoped, tag = 'scratch operand']
  %s0 = inlined_call_operand.hbm [shape: f32[2,4,16,16], index: 0, kind: input, shape index: {}]
  %s1 = inlined_call_operand.hbm [shape: f32[16,16], index: 1, kind: input, shape index: {}]
  %s2 = inlined_call_operand.hbm [shape: f32[16,16], index: 2, kind: input, shape index: {}]
  %s3 = inlined_call_operand.hbm [shape: f32[2,1,16,16], index: 3, kind: output, shape index: {}]
  %s4 = sld [smem:[#allocation0]]
  $region65: #{tpu_custom_call.1} parent=0
    _
  %s6 = ssub.s32 1, %s4
  %s7 = scalar_select 0, %s6, %s4
  $region1: #{tpu_custom_call.1} parent=0
    #allocation4 [shape = 'u8[65536]{0}', space=vmem, size = 0x10000, scoped, tag = 'input window, operand 0']
    #allocation5 [shape = 's32[2]{0}', space=sflag, size = 0x8, scoped, tag = 'scoped memory for tpu_custom_call.1']
    #allocation6 [shape = 's32[2]{0}', space=sflag, size = 0x8, scoped, tag = 'scoped memory for tpu_custom_call.1']
    #allocation7 [shape = 'u8[8192]{0}', space=vmem, size = 0x2000, scoped, tag = 'input window, operand 1, single buffered']
    #allocation8 [shape = 's32[1]{0}', space=sflag, size = 0x4, scoped, tag = 'scoped memory for tpu_custom_call.1']
    #allocation9 [shape = 'u8[8192]{0}', space=vmem, size = 0x2000, scoped, tag = 'input window, operand 2, single buffered']
    #allocation10 [shape = 'u8[16384]{0}', space=vmem, size = 0x4000, scoped, tag = 'output window, operand 0']
    %8 = vsyncpa [#allocation5], 0
    %s9 = scalar_lea.sflag [#allocation5], 1
    %10 = vsyncpa %s9, 0
    %11 = vsyncpa [#allocation8], 0
    %12 = vsyncpa [#allocation6], 0
    %s13 = scalar_lea.sflag [#allocation6], 1
    %14 = vsyncpa %s13, 0
    loop: start=0, step=1, limit=4
    $region2: #{tpu_custom_call.1} parent=1 // loop_pre_header
      _
    $region3: #{tpu_custom_call.1} parent=1 // loop_header
      %s16 = sphi 0, %s20
      %p17 = scmp.ge.s32.totalorder %s16, 4
      %s23 = sphi 0, %s42
      %s24 = sphi 0, %s38
      %s25 = sphi 0, %s34
      %s26 = sphi 0, %s23
      %s27 = sphi 0, %s24
      %s28 = sphi 0, %s25
      %s29 = sphi 0, %s26
      %s30 = sphi 0, %s27
      %s31 = sphi 0, %s28
      %s49 = sphi 0, %s51
      %s52 = sphi 0, %s49
      %s53 = sphi 0, %s52
      %s69 = sphi 0, %s53
      %s73 = sphi 0, %s73
      %s75 = sphi 0, %s73
      %s76 = sphi 0, %s75
      %s90 = sphi 0, %s76
      %s94 = sphi 0, %s94
      %s96 = sphi 0, %s94
      %s97 = sphi 0, %s96
      %s111 = sphi 0, %s97
      %s119 = sphi 0, %s121
      %s122 = sphi 0, %s119
      %s123 = sphi 0, %s122
      %s139 = sphi 0, %s123
    $region4: #{tpu_custom_call.1} parent=1 // loop_header_branch
      %19 = sbr.rel (%p17) target = $region8
    $region5: #{tpu_custom_call.1} parent=1 // loop_body
      %s21 = ssub.s32 %s16, 1
      %s22 = ssub.s32 %s16, 2
      %s32 = sadd.s32 1, %s25
      %p33 = scmp.ge.s32.totalorder %s32, 1
      %s34 = scalar_select %p33, 0, %s32
      %s35 = sadd.s32 1, %s24
      %s36 = scalar_select %p33, %s35, %s24
      %p37 = scmp.ge.s32.totalorder %s36, 1
      %s38 = scalar_select %p37, 0, %s36
      %s39 = sadd.s32 1, %s23
      %s40 = scalar_select %p37, %s39, %s23
      %p41 = scmp.ge.s32.totalorder %s40, 2
      %s42 = scalar_select %p41, 0, %s40
      %s43 = ssub.s32 %s23, %s42
      %s44 = ssub.s32 %s25, %s34
      %s45 = sor.u32 %s43, %s44
      %s46 = ssub.s32 %s24, %s38
      %s47 = sor.u32 %s45, %s46
      %p48 = scmp.eq.s32.totalorder %s47, 0
      %s50 = sadd.s32 %s49, 1
      %s51 = scalar_select %p48, %s49, %s50
      %p54 = pneg %p48
      %p55 = scmp.eq.s32.totalorder %s16, 1
      %p56 = por %p54, %p55
      %p57 = scmp.ne.s32.totalorder %s49, %s52
      %p58 = scmp.eq.s32.totalorder %s16, 0
      %p59 = por %p57, %p58
      %p60 = scmp.ne.s32.totalorder %s49, %s52
      %p61 = scmp.eq.s32.totalorder %s21, 1
      %p62 = por %p60, %p61
      %p63 = scmp.ne.s32.totalorder %s52, %s53
      %p64 = scmp.eq.s32.totalorder %s21, 0
      %p65 = por %p63, %p64
      %p66 = scmp.ne.s32.totalorder %s52, %s53
      %p67 = scmp.eq.s32.totalorder %s22, 1
      %p68 = por %p66, %p67
      %p70 = scmp.ne.s32.totalorder %s53, %s69
      %p71 = scmp.eq.s32.totalorder %s22, 0
      %p72 = por %p70, %p71
      %s74 = sadd.s32 %s73, 1
      %p77 = scmp.eq.s32.totalorder %s16, 1
      %p78 = scmp.ne.s32.totalorder %s73, %s75
      %p79 = scmp.eq.s32.totalorder %s16, 0
      %p80 = por %p78, %p79
      %p81 = scmp.ne.s32.totalorder %s73, %s75
      %p82 = scmp.eq.s32.totalorder %s21, 1
      %p83 = por %p81, %p82
      %p84 = scmp.ne.s32.totalorder %s75, %s76
      %p85 = scmp.eq.s32.totalorder %s21, 0
      %p86 = por %p84, %p85
      %p87 = scmp.ne.s32.totalorder %s75, %s76
      %p88 = scmp.eq.s32.totalorder %s22, 1
      %p89 = por %p87, %p88
      %p91 = scmp.ne.s32.totalorder %s76, %s90
      %p92 = scmp.eq.s32.totalorder %s22, 0
      %p93 = por %p91, %p92
      %s95 = sadd.s32 %s94, 1
      %p98 = scmp.eq.s32.totalorder %s16, 1
      %p99 = scmp.ne.s32.totalorder %s94, %s96
      %p100 = scmp.eq.s32.totalorder %s16, 0
      %p101 = por %p99, %p100
      %p102 = scmp.ne.s32.totalorder %s94, %s96
      %p103 = scmp.eq.s32.totalorder %s21, 1
      %p104 = por %p102, %p103
      %p105 = scmp.ne.s32.totalorder %s96, %s97
      %p106 = scmp.eq.s32.totalorder %s21, 0
      %p107 = por %p105, %p106
      %p108 = scmp.ne.s32.totalorder %s96, %s97
      %p109 = scmp.eq.s32.totalorder %s22, 1
      %p110 = por %p108, %p109
      %p112 = scmp.ne.s32.totalorder %s97, %s111
      %p113 = scmp.eq.s32.totalorder %s22, 0
      %p114 = por %p112, %p113
      %s115 = ssub.s32 %s23, %s42
      %s116 = ssub.s32 %s24, %s38
      %s117 = sor.u32 %s115, %s116
      %p118 = scmp.eq.s32.totalorder %s117, 0
      %s120 = sadd.s32 %s119, 1
      %s121 = scalar_select %p118, %s119, %s120
      %p124 = pneg %p118
      %p125 = scmp.eq.s32.totalorder %s16, 1
      %p126 = por %p124, %p125
      %p127 = scmp.ne.s32.totalorder %s119, %s122
      %p128 = scmp.eq.s32.totalorder %s16, 0
      %p129 = por %p127, %p128
      %p130 = scmp.ne.s32.totalorder %s119, %s122
      %p131 = scmp.eq.s32.totalorder %s21, 1
      %p132 = por %p130, %p131
      %p133 = scmp.ne.s32.totalorder %s122, %s123
      %p134 = scmp.eq.s32.totalorder %s21, 0
      %p135 = por %p133, %p134
      %p136 = scmp.ne.s32.totalorder %s122, %s123
      %p137 = scmp.eq.s32.totalorder %s22, 1
      %p138 = por %p136, %p137
      %p140 = scmp.ne.s32.totalorder %s123, %s139
      %p141 = scmp.eq.s32.totalorder %s22, 0
      %p142 = por %p140, %p141
      %p143 = scmp.le.s32.totalorder 1, %s16
      %p144 = scmp.lt.s32.totalorder %s16, 3
      %p145 = pnand %p143, %p144
      %p146 = pneg %p145
      // Predicated region
      $region9: #{tpu_custom_call.1} parent=5 // pred_check
        _
      $region10: #{tpu_custom_call.1} parent=5 // pred_check_branch
        %148 = sbr.rel (%p145) target = $region12
      $region11: #{tpu_custom_call.1} parent=5 // pred_region
        %s149 = ssub.s32 %s16, 1
        // Predicated region
        $region13: #{tpu_custom_call.1} parent=11 // pred_check
          %p150 = pneg %p86
        $region14: #{tpu_custom_call.1} parent=11 // pred_check_branch
          %152 = sbr.rel (%p150) target = $region16
        $region15: #{tpu_custom_call.1} parent=11 // pred_region
          %s154 = ssub.s32 256, 256
          %155 = vsyncadd [#allocation8], %s154
          %s156 = sshll.u32 [#allocation7], 4
          %s157 = int_to_ptr.vmem [resolvable:$true] %s156
          %162 = dma.hbm_to_vmem [thread:$0]  %s1, 256, %s157, [#allocation8], 128, 128, 8
        $region16: #{tpu_custom_call.1} parent=11 // pred_fallthru
          _
        // Predicated region
        $region17: #{tpu_custom_call.1} parent=11 // pred_check
          %p163 = pneg %p107
        $region18: #{tpu_custom_call.1} parent=11 // pred_check_branch
          %165 = sbr.rel (%p163) target = $region20
        $region19: #{tpu_custom_call.1} parent=11 // pred_region
          %s167 = ssub.s32 256, 256
          %168 = vsyncadd [#allocation8], %s167
          %s169 = sshll.u32 [#allocation9], 4
          %s170 = int_to_ptr.vmem [resolvable:$true] %s169
          %175 = dma.hbm_to_vmem [thread:$0]  %s2, 256, %s170, [#allocation8], 128, 128, 8
        $region20: #{tpu_custom_call.1} parent=11 // pred_fallthru
          _
      $region12: #{tpu_custom_call.1} parent=5 // pred_fallthru
        _
      %p176 = scmp.lt.s32.totalorder %s16, 2
      // Predicated region
      $region21: #{tpu_custom_call.1} parent=5 // pred_check
        %p177 = pneg %p176
      $region22: #{tpu_custom_call.1} parent=5 // pred_check_branch
        %179 = sbr.rel (%p177) target = $region24
      $region23: #{tpu_custom_call.1} parent=5 // pred_region
        // Predicated region
        $region25: #{tpu_custom_call.1} parent=23 // pred_check
          %p180 = pneg %p59
        $region26: #{tpu_custom_call.1} parent=23 // pred_check_branch
          %182 = sbr.rel (%p180) target = $region28
        $region27: #{tpu_custom_call.1} parent=23 // pred_region
          %s183 = sand.u32 %s49, 1
          %s184 = scalar_lea.sflag [#allocation5], %s183
          %s185 = sand.u32 %s49, 1
          %s186 = smul.addr %s185, 64
          %s187 = scalar_lea.vmem [#allocation4], %s186
          %s188 = smul.u32 4, %s25
          %s189 = smul.u32 2, %s24
          %s191 = ssub.s32 1024, 1024
          %192 = vsyncadd %s184, %s191
          %s193 = smul.addr %s188, 2
          %s194 = sadd.s32 %s189, %s193
          %s195 = smul.addr %s23, 8
          %s196 = sadd.s32 %s194, %s195
          %s197 = smul.addr %s196, 128
          %s198 = scalar_lea.hbm %s0, %s197
          %s199 = sshll.u32 %s187, 4
          %s200 = int_to_ptr.vmem [resolvable:$true] %s199
          %205 = dma.hbm_to_vmem [thread:$0]  %s198, 1024, %s200, %s184, 128, 128, 8
        $region28: #{tpu_custom_call.1} parent=23 // pred_fallthru
          _
      $region24: #{tpu_custom_call.1} parent=5 // pred_fallthru
        _
      %p206 = scmp.le.s32.totalorder 1, %s16
      %p207 = scmp.lt.s32.totalorder %s16, 3
      %p208 = pnand %p206, %p207
      %p209 = pneg %p208
      // Predicated region
      $region29: #{tpu_custom_call.1} parent=5 // pred_check
        _
      $region30: #{tpu_custom_call.1} parent=5 // pred_check_branch
        %211 = sbr.rel (%p208) target = $region32
      $region31: #{tpu_custom_call.1} parent=5 // pred_region
        %s212 = ssub.s32 %s16, 1
        %s213 = sand.u32 %s52, 1
        %s214 = scalar_lea.sflag [#allocation5], %s213
        %s215 = sand.u32 %s52, 1
        %s216 = smul.addr %s215, 64
        %s217 = scalar_lea.vmem [#allocation4], %s216
        // Predicated region
        $region33: #{tpu_custom_call.1} parent=31 // pred_check
          %p218 = pneg %p65
        $region34: #{tpu_custom_call.1} parent=31 // pred_check_branch
          %220 = sbr.rel (%p218) target = $region36
        $region35: #{tpu_custom_call.1} parent=31 // pred_region
          %221 = dma.done %s214, 1024
        $region36: #{tpu_custom_call.1} parent=31 // pred_fallthru
          _
        // Predicated region
        $region37: #{tpu_custom_call.1} parent=31 // pred_check
          %p222 = pneg %p86
        $region38: #{tpu_custom_call.1} parent=31 // pred_check_branch
          %224 = sbr.rel (%p222) target = $region40
        $region39: #{tpu_custom_call.1} parent=31 // pred_region
          %225 = dma.done [#allocation8], 256
        $region40: #{tpu_custom_call.1} parent=31 // pred_fallthru
          _
        // Predicated region
        $region41: #{tpu_custom_call.1} parent=31 // pred_check
          %p226 = pneg %p107
        $region42: #{tpu_custom_call.1} parent=31 // pred_check_branch
          %228 = sbr.rel (%p226) target = $region44
        $region43: #{tpu_custom_call.1} parent=31 // pred_region
          %229 = dma.done [#allocation8], 256
        $region44: #{tpu_custom_call.1} parent=31 // pred_fallthru
          _
        %s230 = sand.u32 %s52, 1
        %s231 = scalar_lea.sflag [#allocation5], %s230
        %s232 = sand.u32 %s52, 1
        %s233 = smul.addr %s232, 64
        %s234 = scalar_lea.vmem [#allocation4], %s233
        %p235 = pneg %p65
        %p236 = pneg %p62
        %p237 = pneg %p86
        %p238 = pneg %p83
        %p239 = pneg %p107
        %p240 = pneg %p104
        %p241 = pneg %p135
        %p242 = pneg %p132
        %s243 = sand.u32 %s122, 1
        %s244 = scalar_lea.sflag [#allocation6], %s243
        %s245 = sand.u32 %s122, 1
        %s246 = smul.addr %s245, 16
        %s247 = scalar_lea.vmem [#allocation10], %s246
        %s248 = smul.u32 4, %s28
        %s249 = smul.u32 2, %s27
        %s250 = smul.u32 2, %s27
        %p251 = scmp.eq.s32.totalorder %s28, 0
        // Predicated region
        $region45: #{tpu_custom_call.1} parent=31 // pred_check
          %p252 = pneg %p251
        $region46: #{tpu_custom_call.1} parent=31 // pred_check_branch
          %254 = sbr.rel (%p252) target = $region48
        $region47: #{tpu_custom_call.1} parent=31 // pred_region
          %vm255 = vcmask 130048
          %256 = vst.msk [vmem:[#allocation2] sm:$0xff] %vm255, 0.0
          %257 = vst.msk [vmem:[#allocation2 + $0x8] sm:$0xff] %vm255, 0.0
          %258 = vst.msk [vmem:[#allocation3] sm:$0xff] %vm255, -inf
          %259 = vst.msk [vmem:[#allocation3 + $0x8] sm:$0xff] %vm255, -inf
        $region48: #{tpu_custom_call.1} parent=31 // pred_fallthru
          _
        %v260 = vld [vmem:[%s217] sm:$0xff]
        %v261 = vld [vmem:[%s217 + $0x8] sm:$0xff]
        %v262 = vld [vmem:[%s217 + $0x10] sm:$0xff]
        %v263 = vld [vmem:[%s217 + $0x18] sm:$0xff]
        %v264 = vld [vmem:[%s217 + $0x20] sm:$0xff]
        %v265 = vld [vmem:[%s217 + $0x28] sm:$0xff]
        %v266 = vld [vmem:[%s217 + $0x30] sm:$0xff]
        %v267 = vld [vmem:[%s217 + $0x38] sm:$0xff]
        %v268 = vld [vmem:[#allocation2] sm:$0xff]
        %v269 = vld [vmem:[#allocation2 + $0x8] sm:$0xff]
        %vm270 = vcmask 130048
        %v271 = vsel %vm270, %v260, 0.0
        %v272 = vsel %vm270, %v262, 0.0
        %v273 = vadd.f32 %v271, %v272
        %v274 = vsel %vm270, %v264, 0.0
        %v275 = vadd.f32 %v273, %v274
        %v276 = vsel %vm270, %v266, 0.0
        %v277 = vadd.f32 %v275, %v276
        %v278 = vsel %vm270, %v261, 0.0
        %v279 = vsel %vm270, %v263, 0.0
        %v280 = vadd.f32 %v278, %v279
        %v281 = vsel %vm270, %v265, 0.0
        %v282 = vadd.f32 %v280, %v281
        %v283 = vsel %vm270, %v267, 0.0
        %v284 = vadd.f32 %v282, %v283
        %v285 = vadd.f32 %v268, %v277
        %v286 = vadd.f32 %v269, %v284
        %287 = vst.msk [vmem:[#allocation2] sm:$0xff] %vm270, %v285
        %288 = vst.msk [vmem:[#allocation2 + $0x8] sm:$0xff] %vm270, %v286
        %v289 = vld [vmem:[#allocation3] sm:$0xff]
        %v290 = vld [vmem:[#allocation3 + $0x8] sm:$0xff]
        %v291 = vsel %vm270, %v260, -inf
        %v292 = vsel %vm270, %v262, -inf
        %v293 = vsel %vm270, %v264, -inf
        %v294 = vmax.f32 %v291, %v293
        %v295 = vsel %vm270, %v266, -inf
        %v296 = vmax.f32 %v292, %v295
        %v297 = vmax.f32 %v294, %v296
        %v298 = vsel %vm270, %v261, -inf
        %v299 = vsel %vm270, %v263, -inf
        %v300 = vsel %vm270, %v265, -inf
        %v301 = vmax.f32 %v298, %v300
        %v302 = vsel %vm270, %v267, -inf
        %v303 = vmax.f32 %v299, %v302
        %v304 = vmax.f32 %v301, %v303
        %v305 = vmax.f32 %v289, %v297
        %v306 = vmax.f32 %v290, %v304
        %307 = vst.msk [vmem:[#allocation3] sm:$0xff] %vm270, %v305
        %308 = vst.msk [vmem:[#allocation3 + $0x8] sm:$0xff] %vm270, %v306
        // Predicated region
        $region49: #{tpu_custom_call.1} parent=31 // pred_check
          %p309 = pneg %p251
        $region50: #{tpu_custom_call.1} parent=31 // pred_check_branch
          %311 = sbr.rel (%p309) target = $region52
        $region51: #{tpu_custom_call.1} parent=31 // pred_region
          %v312 = vld [vmem:[#allocation2] sm:$0xff]
          %v313 = vld [vmem:[#allocation2 + $0x8] sm:$0xff]
          %v314 = vld [vmem:[#allocation7] sm:$0xff]
          %v315 = vld [vmem:[#allocation7 + $0x8] sm:$0xff]
          %v316 = vld [vmem:[#allocation3] sm:$0xff]
          %v317 = vld [vmem:[#allocation3 + $0x8] sm:$0xff]
          %v318 = vld [vmem:[#allocation9] sm:$0xff]
          %v319 = vld [vmem:[#allocation9 + $0x8] sm:$0xff]
          %v321 = vsel %vm270, %v316, 0
          %v324 = vsel %vm270, %v317, 0
          %326 = vmatprep.subr.mxu0 0.0
          %327 = vmatpush1.msra.mxu0 0.0
          %328 = vmatprep.subr.mxu0 0.0
          %329 = vmatpush1.msra.mxu0 0.0
          %330 = vmatprep.subr.mxu0 0.0
          %331 = vmatpush1.msra.mxu0 0.0
          %332 = vmatprep.subr.mxu0 0.0
          %333 = vmatpush1.msra.mxu0 0.0
          %334 = vmatprep.subr.mxu0 0.0
          %335 = vmatpush1.msra.mxu0 0.0
          %336 = vmatprep.subr.mxu0 0.0
          %337 = vmatpush1.msra.mxu0 0.0
          %338 = vmatprep.subr.mxu0 0.0
          %339 = vmatpush1.msra.mxu0 0.0
          %340 = vmatprep.subr.mxu0 0.0
          %341 = vmatpush1.msra.mxu0 0.0
          %342 = vmatprep.subr.mxu0 0.0
          %343 = vmatpush1.msra.mxu0 0.0
          %344 = vmatprep.subr.mxu0 0.0
          %345 = vmatpush1.msra.mxu0 0.0
          %346 = vmatprep.subr.mxu0 0.0
          %347 = vmatpush1.msra.mxu0 0.0
          %348 = vmatprep.subr.mxu0 0.0
          %349 = vmatpush1.msra.mxu0 0.0
          %350 = vmatprep.subr.mxu0 0.0
          %351 = vmatpush1.msra.mxu0 0.0
          %352 = vmatprep.subr.mxu0 0.0
          %353 = vmatpush1.msra.mxu0 0.0
          %354 = vmatprep.subr.mxu0 0.0
          %v355 = vand.u32 %v319, 4294901760
          %356 = vmatpush1.msra.mxu0 %v355
          %357 = vmatprep.subr.mxu0 0.0
          %v358 = vand.u32 %v318, 4294901760
          %359 = vmatpush1.msra.mxu0 %v358
          %360 = vmatprep.subr.mxu0 0.0
          %361 = vmatpush2.msra.mxu0 0.0
          %362 = vmatprep.subr.mxu0 0.0
          %363 = vmatpush2.msra.mxu0 0.0
          %364 = vmatprep.subr.mxu0 0.0
          %365 = vmatpush2.msra.mxu0 0.0
          %366 = vmatprep.subr.mxu0 0.0
          %367 = vmatpush2.msra.mxu0 0.0
          %368 = vmatprep.subr.mxu0 0.0
          %369 = vmatpush2.msra.mxu0 0.0
          %370 = vmatprep.subr.mxu0 0.0
          %371 = vmatpush2.msra.mxu0 0.0
          %372 = vmatprep.subr.mxu0 0.0
          %373 = vmatpush2.msra.mxu0 0.0
          %374 = vmatprep.subr.mxu0 0.0
          %375 = vmatpush2.msra.mxu0 0.0
          %376 = vmatprep.subr.mxu0 0.0
          %377 = vmatpush2.msra.mxu0 0.0
          %378 = vmatprep.subr.mxu0 0.0
          %379 = vmatpush2.msra.mxu0 0.0
          %380 = vmatprep.subr.mxu0 0.0
          %381 = vmatpush2.msra.mxu0 0.0
          %382 = vmatprep.subr.mxu0 0.0
          %383 = vmatpush2.msra.mxu0 0.0
          %384 = vmatprep.subr.mxu0 0.0
          %385 = vmatpush2.msra.mxu0 0.0
          %386 = vmatprep.subr.mxu0 0.0
          %387 = vmatpush2.msra.mxu0 0.0
          %388 = vmatprep.subr.mxu0 0.0
          %389 = vmatpush2.msra.mxu0 0.0
          %390 = vmatprep.subr.mxu0 0.0
          %391 = vmatpush2.msra.mxu0 0.0
          %392 = vmatprep.mubr.f32.mxu0 0.0
          %v393 = vand.u32 %v321, 4294901760
          %v394 = vsub.f32 %v321, %v393
          %v395 = vand.u32 %v394, 4294901760
          %v396 = vsub.f32 %v394, %v395
          %v397 = vand.u32 %v396, 4294901760
          %398 = vmatmul.mubr.f32.gmra.mxu0 %v397
          %v399 = vpop.f32.mrf.mxu0
          %v400 = vadd.f32 0.0, %v399
          %v401 = vpop.f32.mrf.mxu0
          %402 = vmatprep.mubr.f32.mxu0 0.0
          %v403 = vand.u32 %v324, 4294901760
          %v404 = vsub.f32 %v324, %v403
          %v405 = vand.u32 %v404, 4294901760
          %v406 = vsub.f32 %v404, %v405
          %v407 = vand.u32 %v406, 4294901760
          %408 = vmatmul.mubr.f32.gmra.mxu0 %v407
          %v409 = vpop.f32.mrf.mxu0
          %v410 = vadd.f32 0.0, %v409
          %v411 = vpop.f32.mrf.mxu0
          %412 = vdwg.mxu0
          %413 = vmatprep.subr.mxu0 0.0
          %414 = vmatpush1.msra.mxu0 0.0
          %415 = vmatprep.subr.mxu0 0.0
          %416 = vmatpush1.msra.mxu0 0.0
          %417 = vmatprep.subr.mxu0 0.0
          %418 = vmatpush1.msra.mxu0 0.0
          %419 = vmatprep.subr.mxu0 0.0
          %420 = vmatpush1.msra.mxu0 0.0
          %421 = vmatprep.subr.mxu0 0.0
          %422 = vmatpush1.msra.mxu0 0.0
          %423 = vmatprep.subr.mxu0 0.0
          %424 = vmatpush1.msra.mxu0 0.0
          %425 = vmatprep.subr.mxu0 0.0
          %426 = vmatpush1.msra.mxu0 0.0
          %427 = vmatprep.subr.mxu0 0.0
          %428 = vmatpush1.msra.mxu0 0.0
          %429 = vmatprep.subr.mxu0 0.0
          %430 = vmatpush1.msra.mxu0 0.0
          %431 = vmatprep.subr.mxu0 0.0
          %432 = vmatpush1.msra.mxu0 0.0
          %433 = vmatprep.subr.mxu0 0.0
          %434 = vmatpush1.msra.mxu0 0.0
          %435 = vmatprep.subr.mxu0 0.0
          %436 = vmatpush1.msra.mxu0 0.0
          %437 = vmatprep.subr.mxu0 0.0
          %438 = vmatpush1.msra.mxu0 0.0
          %439 = vmatprep.subr.mxu0 0.0
          %440 = vmatpush1.msra.mxu0 0.0
          %441 = vmatprep.subr.mxu0 0.0
          %v442 = vand.u32 %v319, 4294901760
          %v443 = vsub.f32 %v319, %v442
          %v444 = vand.u32 %v443, 4294901760
          %v445 = vsub.f32 %v443, %v444
          %v446 = vand.u32 %v445, 4294901760
          %447 = vmatpush1.msra.mxu0 %v446
          %448 = vmatprep.subr.mxu0 0.0
          %v449 = vand.u32 %v318, 4294901760
          %v450 = vsub.f32 %v318, %v449
          %v451 = vand.u32 %v450, 4294901760
          %v452 = vsub.f32 %v450, %v451
          %v453 = vand.u32 %v452, 4294901760
          %454 = vmatpush1.msra.mxu0 %v453
          %455 = vmatprep.subr.mxu0 0.0
          %456 = vmatpush2.msra.mxu0 0.0
          %457 = vmatprep.subr.mxu0 0.0
          %458 = vmatpush2.msra.mxu0 0.0
          %459 = vmatprep.subr.mxu0 0.0
          %460 = vmatpush2.msra.mxu0 0.0
          %461 = vmatprep.subr.mxu0 0.0
          %462 = vmatpush2.msra.mxu0 0.0
          %463 = vmatprep.subr.mxu0 0.0
          %464 = vmatpush2.msra.mxu0 0.0
          %465 = vmatprep.subr.mxu0 0.0
          %466 = vmatpush2.msra.mxu0 0.0
          %467 = vmatprep.subr.mxu0 0.0
          %468 = vmatpush2.msra.mxu0 0.0
          %469 = vmatprep.subr.mxu0 0.0
          %470 = vmatpush2.msra.mxu0 0.0
          %471 = vmatprep.subr.mxu0 0.0
          %472 = vmatpush2.msra.mxu0 0.0
          %473 = vmatprep.subr.mxu0 0.0
          %474 = vmatpush2.msra.mxu0 0.0
          %475 = vmatprep.subr.mxu0 0.0
          %476 = vmatpush2.msra.mxu0 0.0
          %477 = vmatprep.subr.mxu0 0.0
          %478 = vmatpush2.msra.mxu0 0.0
          %479 = vmatprep.subr.mxu0 0.0
          %480 = vmatpush2.msra.mxu0 0.0
          %481 = vmatprep.subr.mxu0 0.0
          %482 = vmatpush2.msra.mxu0 0.0
          %483 = vmatprep.subr.mxu0 0.0
          %484 = vmatpush2.msra.mxu0 0.0
          %485 = vmatprep.subr.mxu0 0.0
          %486 = vmatpush2.msra.mxu0 0.0
          %487 = vmatprep.mubr.f32.mxu0 0.0
          %v488 = vand.u32 %v321, 4294901760
          %489 = vmatmul.mubr.f32.gmra.mxu0 %v488
          %v490 = vpop.f32.mrf.mxu0
          %v491 = vadd.f32 %v400, %v490
          %v492 = vpop.f32.mrf.mxu0
          %493 = vmatprep.mubr.f32.mxu0 0.0
          %v494 = vand.u32 %v324, 4294901760
          %495 = vmatmul.mubr.f32.gmra.mxu0 %v494
          %v496 = vpop.f32.mrf.mxu0
          %v497 = vadd.f32 %v410, %v496
          %v498 = vpop.f32.mrf.mxu0
          %499 = vdwg.mxu0
          %500 = vmatprep.subr.mxu0 0.0
          %501 = vmatpush1.msra.mxu0 0.0
          %502 = vmatprep.subr.mxu0 0.0
          %503 = vmatpush1.msra.mxu0 0.0
          %504 = vmatprep.subr.mxu0 0.0
          %505 = vmatpush1.msra.mxu0 0.0
          %506 = vmatprep.subr.mxu0 0.0
          %507 = vmatpush1.msra.mxu0 0.0
          %508 = vmatprep.subr.mxu0 0.0
          %509 = vmatpush1.msra.mxu0 0.0
          %510 = vmatprep.subr.mxu0 0.0
          %511 = vmatpush1.msra.mxu0 0.0
          %512 = vmatprep.subr.mxu0 0.0
          %513 = vmatpush1.msra.mxu0 0.0
          %514 = vmatprep.subr.mxu0 0.0
          %515 = vmatpush1.msra.mxu0 0.0
          %516 = vmatprep.subr.mxu0 0.0
          %517 = vmatpush1.msra.mxu0 0.0
          %518 = vmatprep.subr.mxu0 0.0
          %519 = vmatpush1.msra.mxu0 0.0
          %520 = vmatprep.subr.mxu0 0.0
          %521 = vmatpush1.msra.mxu0 0.0
          %522 = vmatprep.subr.mxu0 0.0
          %523 = vmatpush1.msra.mxu0 0.0
          %524 = vmatprep.subr.mxu0 0.0
          %525 = vmatpush1.msra.mxu0 0.0
          %526 = vmatprep.subr.mxu0 0.0
          %527 = vmatpush1.msra.mxu0 0.0
          %528 = vmatprep.subr.mxu0 0.0
          %v529 = vand.u32 %v319, 4294901760
          %v530 = vsub.f32 %v319, %v529
          %531 = vmatpush1.msra.mxu0 %v530
          %532 = vmatprep.subr.mxu0 0.0
          %v533 = vand.u32 %v318, 4294901760
          %v534 = vsub.f32 %v318, %v533
          %535 = vmatpush1.msra.mxu0 %v534
          %536 = vmatprep.subr.mxu0 0.0
          %537 = vmatpush2.msra.mxu0 0.0
          %538 = vmatprep.subr.mxu0 0.0
          %539 = vmatpush2.msra.mxu0 0.0
          %540 = vmatprep.subr.mxu0 0.0
          %541 = vmatpush2.msra.mxu0 0.0
          %542 = vmatprep.subr.mxu0 0.0
          %543 = vmatpush2.msra.mxu0 0.0
          %544 = vmatprep.subr.mxu0 0.0
          %545 = vmatpush2.msra.mxu0 0.0
          %546 = vmatprep.subr.mxu0 0.0
          %547 = vmatpush2.msra.mxu0 0.0
          %548 = vmatprep.subr.mxu0 0.0
          %549 = vmatpush2.msra.mxu0 0.0
          %550 = vmatprep.subr.mxu0 0.0
          %551 = vmatpush2.msra.mxu0 0.0
          %552 = vmatprep.subr.mxu0 0.0
          %553 = vmatpush2.msra.mxu0 0.0
          %554 = vmatprep.subr.mxu0 0.0
          %555 = vmatpush2.msra.mxu0 0.0
          %556 = vmatprep.subr.mxu0 0.0
          %557 = vmatpush2.msra.mxu0 0.0
          %558 = vmatprep.subr.mxu0 0.0
          %559 = vmatpush2.msra.mxu0 0.0
          %560 = vmatprep.subr.mxu0 0.0
          %561 = vmatpush2.msra.mxu0 0.0
          %562 = vmatprep.subr.mxu0 0.0
          %563 = vmatpush2.msra.mxu0 0.0
          %564 = vmatprep.subr.mxu0 0.0
          %565 = vmatpush2.msra.mxu0 0.0
          %566 = vmatprep.subr.mxu0 0.0
          %567 = vmatpush2.msra.mxu0 0.0
          %568 = vmatprep.mubr.f32.mxu0 0.0
          %v569 = vand.u32 %v321, 4294901760
          %v570 = vsub.f32 %v321, %v569
          %571 = vmatmul.mubr.f32.gmra.mxu0 %v570
          %v572 = vpop.f32.mrf.mxu0
          %v573 = vadd.f32 %v491, %v572
          %v574 = vpop.f32.mrf.mxu0
          %575 = vmatprep.mubr.f32.mxu0 0.0
          %v576 = vand.u32 %v324, 4294901760
          %v577 = vsub.f32 %v324, %v576
          %578 = vmatmul.mubr.f32.gmra.mxu0 %v577
          %v579 = vpop.f32.mrf.mxu0
          %v580 = vadd.f32 %v497, %v579
          %v581 = vpop.f32.mrf.mxu0
          %582 = vdwg.mxu0
          %583 = vmatprep.subr.mxu0 0.0
          %584 = vmatpush1.msra.mxu0 0.0
          %585 = vmatprep.subr.mxu0 0.0
          %586 = vmatpush1.msra.mxu0 0.0
          %587 = vmatprep.subr.mxu0 0.0
          %588 = vmatpush1.msra.mxu0 0.0
          %589 = vmatprep.subr.mxu0 0.0
          %590 = vmatpush1.msra.mxu0 0.0
          %591 = vmatprep.subr.mxu0 0.0
          %592 = vmatpush1.msra.mxu0 0.0
          %593 = vmatprep.subr.mxu0 0.0
          %594 = vmatpush1.msra.mxu0 0.0
          %595 = vmatprep.subr.mxu0 0.0
          %596 = vmatpush1.msra.mxu0 0.0
          %597 = vmatprep.subr.mxu0 0.0
          %598 = vmatpush1.msra.mxu0 0.0
          %599 = vmatprep.subr.mxu0 0.0
          %600 = vmatpush1.msra.mxu0 0.0
          %601 = vmatprep.subr.mxu0 0.0
          %602 = vmatpush1.msra.mxu0 0.0
          %603 = vmatprep.subr.mxu0 0.0
          %604 = vmatpush1.msra.mxu0 0.0
          %605 = vmatprep.subr.mxu0 0.0
          %606 = vmatpush1.msra.mxu0 0.0
          %607 = vmatprep.subr.mxu0 0.0
          %608 = vmatpush1.msra.mxu0 0.0
          %609 = vmatprep.subr.mxu0 0.0
          %610 = vmatpush1.msra.mxu0 0.0
          %611 = vmatprep.subr.mxu0 0.0
          %v612 = vand.u32 %v319, 4294901760
          %613 = vmatpush1.msra.mxu0 %v612
          %614 = vmatprep.subr.mxu0 0.0
          %v615 = vand.u32 %v318, 4294901760
          %616 = vmatpush1.msra.mxu0 %v615
          %617 = vmatprep.subr.mxu0 0.0
          %618 = vmatpush2.msra.mxu0 0.0
          %619 = vmatprep.subr.mxu0 0.0
          %620 = vmatpush2.msra.mxu0 0.0
          %621 = vmatprep.subr.mxu0 0.0
          %622 = vmatpush2.msra.mxu0 0.0
          %623 = vmatprep.subr.mxu0 0.0
          %624 = vmatpush2.msra.mxu0 0.0
          %625 = vmatprep.subr.mxu0 0.0
          %626 = vmatpush2.msra.mxu0 0.0
          %627 = vmatprep.subr.mxu0 0.0
          %628 = vmatpush2.msra.mxu0 0.0
          %629 = vmatprep.subr.mxu0 0.0
          %630 = vmatpush2.msra.mxu0 0.0
          %631 = vmatprep.subr.mxu0 0.0
          %632 = vmatpush2.msra.mxu0 0.0
          %633 = vmatprep.subr.mxu0 0.0
          %634 = vmatpush2.msra.mxu0 0.0
          %635 = vmatprep.subr.mxu0 0.0
          %636 = vmatpush2.msra.mxu0 0.0
          %637 = vmatprep.subr.mxu0 0.0
          %638 = vmatpush2.msra.mxu0 0.0
          %639 = vmatprep.subr.mxu0 0.0
          %640 = vmatpush2.msra.mxu0 0.0
          %641 = vmatprep.subr.mxu0 0.0
          %642 = vmatpush2.msra.mxu0 0.0
          %643 = vmatprep.subr.mxu0 0.0
          %644 = vmatpush2.msra.mxu0 0.0
          %645 = vmatprep.subr.mxu0 0.0
          %646 = vmatpush2.msra.mxu0 0.0
          %647 = vmatprep.subr.mxu0 0.0
          %648 = vmatpush2.msra.mxu0 0.0
          %649 = vmatprep.mubr.f32.mxu0 0.0
          %v650 = vand.u32 %v321, 4294901760
          %v651 = vsub.f32 %v321, %v650
          %v652 = vand.u32 %v651, 4294901760
          %653 = vmatmul.mubr.f32.gmra.mxu0 %v652
          %v654 = vpop.f32.mrf.mxu0
          %v655 = vadd.f32 %v573, %v654
          %v656 = vpop.f32.mrf.mxu0
          %657 = vmatprep.mubr.f32.mxu0 0.0
          %v658 = vand.u32 %v324, 4294901760
          %v659 = vsub.f32 %v324, %v658
          %v660 = vand.u32 %v659, 4294901760
          %661 = vmatmul.mubr.f32.gmra.mxu0 %v660
          %v662 = vpop.f32.mrf.mxu0
          %v663 = vadd.f32 %v580, %v662
          %v664 = vpop.f32.mrf.mxu0
          %665 = vdwg.mxu0
          %666 = vmatprep.subr.mxu0 0.0
          %667 = vmatpush1.msra.mxu0 0.0
          %668 = vmatprep.subr.mxu0 0.0
          %669 = vmatpush1.msra.mxu0 0.0
          %670 = vmatprep.subr.mxu0 0.0
          %671 = vmatpush1.msra.mxu0 0.0
          %672 = vmatprep.subr.mxu0 0.0
          %673 = vmatpush1.msra.mxu0 0.0
          %674 = vmatprep.subr.mxu0 0.0
          %675 = vmatpush1.msra.mxu0 0.0
          %676 = vmatprep.subr.mxu0 0.0
          %677 = vmatpush1.msra.mxu0 0.0
          %678 = vmatprep.subr.mxu0 0.0
          %679 = vmatpush1.msra.mxu0 0.0
          %680 = vmatprep.subr.mxu0 0.0
          %681 = vmatpush1.msra.mxu0 0.0
          %682 = vmatprep.subr.mxu0 0.0
          %683 = vmatpush1.msra.mxu0 0.0
          %684 = vmatprep.subr.mxu0 0.0
          %685 = vmatpush1.msra.mxu0 0.0
          %686 = vmatprep.subr.mxu0 0.0
          %687 = vmatpush1.msra.mxu0 0.0
          %688 = vmatprep.subr.mxu0 0.0
          %689 = vmatpush1.msra.mxu0 0.0
          %690 = vmatprep.subr.mxu0 0.0
          %691 = vmatpush1.msra.mxu0 0.0
          %692 = vmatprep.subr.mxu0 0.0
          %693 = vmatpush1.msra.mxu0 0.0
          %694 = vmatprep.subr.mxu0 0.0
          %v695 = vand.u32 %v319, 4294901760
          %v696 = vsub.f32 %v319, %v695
          %v697 = vand.u32 %v696, 4294901760
          %698 = vmatpush1.msra.mxu0 %v697
          %699 = vmatprep.subr.mxu0 0.0
          %v700 = vand.u32 %v318, 4294901760
          %v701 = vsub.f32 %v318, %v700
          %v702 = vand.u32 %v701, 4294901760
          %703 = vmatpush1.msra.mxu0 %v702
          %704 = vmatprep.subr.mxu0 0.0
          %705 = vmatpush2.msra.mxu0 0.0
          %706 = vmatprep.subr.mxu0 0.0
          %707 = vmatpush2.msra.mxu0 0.0
          %708 = vmatprep.subr.mxu0 0.0
          %709 = vmatpush2.msra.mxu0 0.0
          %710 = vmatprep.subr.mxu0 0.0
          %711 = vmatpush2.msra.mxu0 0.0
          %712 = vmatprep.subr.mxu0 0.0
          %713 = vmatpush2.msra.mxu0 0.0
          %714 = vmatprep.subr.mxu0 0.0
          %715 = vmatpush2.msra.mxu0 0.0
          %716 = vmatprep.subr.mxu0 0.0
          %717 = vmatpush2.msra.mxu0 0.0
          %718 = vmatprep.subr.mxu0 0.0
          %719 = vmatpush2.msra.mxu0 0.0
          %720 = vmatprep.subr.mxu0 0.0
          %721 = vmatpush2.msra.mxu0 0.0
          %722 = vmatprep.subr.mxu0 0.0
          %723 = vmatpush2.msra.mxu0 0.0
          %724 = vmatprep.subr.mxu0 0.0
          %725 = vmatpush2.msra.mxu0 0.0
          %726 = vmatprep.subr.mxu0 0.0
          %727 = vmatpush2.msra.mxu0 0.0
          %728 = vmatprep.subr.mxu0 0.0
          %729 = vmatpush2.msra.mxu0 0.0
          %730 = vmatprep.subr.mxu0 0.0
          %731 = vmatpush2.msra.mxu0 0.0
          %732 = vmatprep.subr.mxu0 0.0
          %733 = vmatpush2.msra.mxu0 0.0
          %734 = vmatprep.subr.mxu0 0.0
          %735 = vmatpush2.msra.mxu0 0.0
          %736 = vmatprep.mubr.f32.mxu0 0.0
          %v737 = vand.u32 %v321, 4294901760
          %738 = vmatmul.mubr.f32.gmra.mxu0 %v737
          %v739 = vpop.f32.mrf.mxu0
          %v740 = vadd.f32 %v655, %v739
          %v741 = vpop.f32.mrf.mxu0
          %742 = vmatprep.mubr.f32.mxu0 0.0
          %v743 = vand.u32 %v324, 4294901760
          %744 = vmatmul.mubr.f32.gmra.mxu0 %v743
          %v745 = vpop.f32.mrf.mxu0
          %v746 = vadd.f32 %v663, %v745
          %v747 = vpop.f32.mrf.mxu0
          %748 = vdwg.mxu0
          %749 = vmatprep.subr.mxu0 0.0
          %750 = vmatpush1.msra.mxu0 0.0
          %751 = vmatprep.subr.mxu0 0.0
          %752 = vmatpush1.msra.mxu0 0.0
          %753 = vmatprep.subr.mxu0 0.0
          %754 = vmatpush1.msra.mxu0 0.0
          %755 = vmatprep.subr.mxu0 0.0
          %756 = vmatpush1.msra.mxu0 0.0
          %757 = vmatprep.subr.mxu0 0.0
          %758 = vmatpush1.msra.mxu0 0.0
          %759 = vmatprep.subr.mxu0 0.0
          %760 = vmatpush1.msra.mxu0 0.0
          %761 = vmatprep.subr.mxu0 0.0
          %762 = vmatpush1.msra.mxu0 0.0
          %763 = vmatprep.subr.mxu0 0.0
          %764 = vmatpush1.msra.mxu0 0.0
          %765 = vmatprep.subr.mxu0 0.0
          %766 = vmatpush1.msra.mxu0 0.0
          %767 = vmatprep.subr.mxu0 0.0
          %768 = vmatpush1.msra.mxu0 0.0
          %769 = vmatprep.subr.mxu0 0.0
          %770 = vmatpush1.msra.mxu0 0.0
          %771 = vmatprep.subr.mxu0 0.0
          %772 = vmatpush1.msra.mxu0 0.0
          %773 = vmatprep.subr.mxu0 0.0
          %774 = vmatpush1.msra.mxu0 0.0
          %775 = vmatprep.subr.mxu0 0.0
          %776 = vmatpush1.msra.mxu0 0.0
          %777 = vmatprep.subr.mxu0 0.0
          %v778 = vand.u32 %v319, 4294901760
          %779 = vmatpush1.msra.mxu0 %v778
          %780 = vmatprep.subr.mxu0 0.0
          %v781 = vand.u32 %v318, 4294901760
          %782 = vmatpush1.msra.mxu0 %v781
          %783 = vmatprep.subr.mxu0 0.0
          %784 = vmatpush2.msra.mxu0 0.0
          %785 = vmatprep.subr.mxu0 0.0
          %786 = vmatpush2.msra.mxu0 0.0
          %787 = vmatprep.subr.mxu0 0.0
          %788 = vmatpush2.msra.mxu0 0.0
          %789 = vmatprep.subr.mxu0 0.0
          %790 = vmatpush2.msra.mxu0 0.0
          %791 = vmatprep.subr.mxu0 0.0
          %792 = vmatpush2.msra.mxu0 0.0
          %793 = vmatprep.subr.mxu0 0.0
          %794 = vmatpush2.msra.mxu0 0.0
          %795 = vmatprep.subr.mxu0 0.0
          %796 = vmatpush2.msra.mxu0 0.0
          %797 = vmatprep.subr.mxu0 0.0
          %798 = vmatpush2.msra.mxu0 0.0
          %799 = vmatprep.subr.mxu0 0.0
          %800 = vmatpush2.msra.mxu0 0.0
          %801 = vmatprep.subr.mxu0 0.0
          %802 = vmatpush2.msra.mxu0 0.0
          %803 = vmatprep.subr.mxu0 0.0
          %804 = vmatpush2.msra.mxu0 0.0
          %805 = vmatprep.subr.mxu0 0.0
          %806 = vmatpush2.msra.mxu0 0.0
          %807 = vmatprep.subr.mxu0 0.0
          %808 = vmatpush2.msra.mxu0 0.0
          %809 = vmatprep.subr.mxu0 0.0
          %810 = vmatpush2.msra.mxu0 0.0
          %811 = vmatprep.subr.mxu0 0.0
          %812 = vmatpush2.msra.mxu0 0.0
          %813 = vmatprep.subr.mxu0 0.0
          %814 = vmatpush2.msra.mxu0 0.0
          %815 = vmatprep.mubr.f32.mxu0 0.0
          %v816 = vand.u32 %v321, 4294901760
          %817 = vmatmul.mubr.f32.gmra.mxu0 %v816
          %v818 = vpop.f32.mrf.mxu0
          %v819 = vadd.f32 %v740, %v818
          %v820 = vpop.f32.mrf.mxu0
          %821 = vmatprep.mubr.f32.mxu0 0.0
          %v822 = vand.u32 %v324, 4294901760
          %823 = vmatmul.mubr.f32.gmra.mxu0 %v822
          %v824 = vpop.f32.mrf.mxu0
          %v825 = vadd.f32 %v746, %v824
          %v826 = vpop.f32.mrf.mxu0
          %827 = vdwg.mxu0
          %v829 = vsel %vm270, %v312, 0
          %v832 = vsel %vm270, %v313, 0
          %834 = vmatprep.subr.mxu0 0.0
          %835 = vmatpush1.msra.mxu0 0.0
          %836 = vmatprep.subr.mxu0 0.0
          %837 = vmatpush1.msra.mxu0 0.0
          %838 = vmatprep.subr.mxu0 0.0
          %839 = vmatpush1.msra.mxu0 0.0
          %840 = vmatprep.subr.mxu0 0.0
          %841 = vmatpush1.msra.mxu0 0.0
          %842 = vmatprep.subr.mxu0 0.0
          %843 = vmatpush1.msra.mxu0 0.0
          %844 = vmatprep.subr.mxu0 0.0
          %845 = vmatpush1.msra.mxu0 0.0
          %846 = vmatprep.subr.mxu0 0.0
          %847 = vmatpush1.msra.mxu0 0.0
          %848 = vmatprep.subr.mxu0 0.0
          %849 = vmatpush1.msra.mxu0 0.0
          %850 = vmatprep.subr.mxu0 0.0
          %851 = vmatpush1.msra.mxu0 0.0
          %852 = vmatprep.subr.mxu0 0.0
          %853 = vmatpush1.msra.mxu0 0.0
          %854 = vmatprep.subr.mxu0 0.0
          %855 = vmatpush1.msra.mxu0 0.0
          %856 = vmatprep.subr.mxu0 0.0
          %857 = vmatpush1.msra.mxu0 0.0
          %858 = vmatprep.subr.mxu0 0.0
          %859 = vmatpush1.msra.mxu0 0.0
          %860 = vmatprep.subr.mxu0 0.0
          %861 = vmatpush1.msra.mxu0 0.0
          %862 = vmatprep.subr.mxu0 0.0
          %v863 = vand.u32 %v315, 4294901760
          %864 = vmatpush1.msra.mxu0 %v863
          %865 = vmatprep.subr.mxu0 0.0
          %v866 = vand.u32 %v314, 4294901760
          %867 = vmatpush1.msra.mxu0 %v866
          %868 = vmatprep.subr.mxu0 0.0
          %869 = vmatpush2.msra.mxu0 0.0
          %870 = vmatprep.subr.mxu0 0.0
          %871 = vmatpush2.msra.mxu0 0.0
          %872 = vmatprep.subr.mxu0 0.0
          %873 = vmatpush2.msra.mxu0 0.0
          %874 = vmatprep.subr.mxu0 0.0
          %875 = vmatpush2.msra.mxu0 0.0
          %876 = vmatprep.subr.mxu0 0.0
          %877 = vmatpush2.msra.mxu0 0.0
          %878 = vmatprep.subr.mxu0 0.0
          %879 = vmatpush2.msra.mxu0 0.0
          %880 = vmatprep.subr.mxu0 0.0
          %881 = vmatpush2.msra.mxu0 0.0
          %882 = vmatprep.subr.mxu0 0.0
          %883 = vmatpush2.msra.mxu0 0.0
          %884 = vmatprep.subr.mxu0 0.0
          %885 = vmatpush2.msra.mxu0 0.0
          %886 = vmatprep.subr.mxu0 0.0
          %887 = vmatpush2.msra.mxu0 0.0
          %888 = vmatprep.subr.mxu0 0.0
          %889 = vmatpush2.msra.mxu0 0.0
          %890 = vmatprep.subr.mxu0 0.0
          %891 = vmatpush2.msra.mxu0 0.0
          %892 = vmatprep.subr.mxu0 0.0
          %893 = vmatpush2.msra.mxu0 0.0
          %894 = vmatprep.subr.mxu0 0.0
          %895 = vmatpush2.msra.mxu0 0.0
          %896 = vmatprep.subr.mxu0 0.0
          %897 = vmatpush2.msra.mxu0 0.0
          %898 = vmatprep.subr.mxu0 0.0
          %899 = vmatpush2.msra.mxu0 0.0
          %900 = vmatprep.mubr.f32.mxu0 0.0
          %v901 = vand.u32 %v829, 4294901760
          %v902 = vsub.f32 %v829, %v901
          %v903 = vand.u32 %v902, 4294901760
          %v904 = vsub.f32 %v902, %v903
          %v905 = vand.u32 %v904, 4294901760
          %906 = vmatmul.mubr.f32.gmra.mxu0 %v905
          %v907 = vpop.f32.mrf.mxu0
          %v908 = vadd.f32 %v819, %v907
          %v909 = vpop.f32.mrf.mxu0
          %910 = vmatprep.mubr.f32.mxu0 0.0
          %v911 = vand.u32 %v832, 4294901760
          %v912 = vsub.f32 %v832, %v911
          %v913 = vand.u32 %v912, 4294901760
          %v914 = vsub.f32 %v912, %v913
          %v915 = vand.u32 %v914, 4294901760
          %916 = vmatmul.mubr.f32.gmra.mxu0 %v915
          %v917 = vpop.f32.mrf.mxu0
          %v918 = vadd.f32 %v825, %v917
          %v919 = vpop.f32.mrf.mxu0
          %920 = vdwg.mxu0
          %921 = vmatprep.subr.mxu0 0.0
          %922 = vmatpush1.msra.mxu0 0.0
          %923 = vmatprep.subr.mxu0 0.0
          %924 = vmatpush1.msra.mxu0 0.0
          %925 = vmatprep.subr.mxu0 0.0
          %926 = vmatpush1.msra.mxu0 0.0
          %927 = vmatprep.subr.mxu0 0.0
          %928 = vmatpush1.msra.mxu0 0.0
          %929 = vmatprep.subr.mxu0 0.0
          %930 = vmatpush1.msra.mxu0 0.0
          %931 = vmatprep.subr.mxu0 0.0
          %932 = vmatpush1.msra.mxu0 0.0
          %933 = vmatprep.subr.mxu0 0.0
          %934 = vmatpush1.msra.mxu0 0.0
          %935 = vmatprep.subr.mxu0 0.0
          %936 = vmatpush1.msra.mxu0 0.0
          %937 = vmatprep.subr.mxu0 0.0
          %938 = vmatpush1.msra.mxu0 0.0
          %939 = vmatprep.subr.mxu0 0.0
          %940 = vmatpush1.msra.mxu0 0.0
          %941 = vmatprep.subr.mxu0 0.0
          %942 = vmatpush1.msra.mxu0 0.0
          %943 = vmatprep.subr.mxu0 0.0
          %944 = vmatpush1.msra.mxu0 0.0
          %945 = vmatprep.subr.mxu0 0.0
          %946 = vmatpush1.msra.mxu0 0.0
          %947 = vmatprep.subr.mxu0 0.0
          %948 = vmatpush1.msra.mxu0 0.0
          %949 = vmatprep.subr.mxu0 0.0
          %v950 = vand.u32 %v315, 4294901760
          %v951 = vsub.f32 %v315, %v950
          %v952 = vand.u32 %v951, 4294901760
          %v953 = vsub.f32 %v951, %v952
          %v954 = vand.u32 %v953, 4294901760
          %955 = vmatpush1.msra.mxu0 %v954
          %956 = vmatprep.subr.mxu0 0.0
          %v957 = vand.u32 %v314, 4294901760
          %v958 = vsub.f32 %v314, %v957
          %v959 = vand.u32 %v958, 4294901760
          %v960 = vsub.f32 %v958, %v959
          %v961 = vand.u32 %v960, 4294901760
          %962 = vmatpush1.msra.mxu0 %v961
          %963 = vmatprep.subr.mxu0 0.0
          %964 = vmatpush2.msra.mxu0 0.0
          %965 = vmatprep.subr.mxu0 0.0
          %966 = vmatpush2.msra.mxu0 0.0
          %967 = vmatprep.subr.mxu0 0.0
          %968 = vmatpush2.msra.mxu0 0.0
          %969 = vmatprep.subr.mxu0 0.0
          %970 = vmatpush2.msra.mxu0 0.0
          %971 = vmatprep.subr.mxu0 0.0
          %972 = vmatpush2.msra.mxu0 0.0
          %973 = vmatprep.subr.mxu0 0.0
          %974 = vmatpush2.msra.mxu0 0.0
          %975 = vmatprep.subr.mxu0 0.0
          %976 = vmatpush2.msra.mxu0 0.0
          %977 = vmatprep.subr.mxu0 0.0
          %978 = vmatpush2.msra.mxu0 0.0
          %979 = vmatprep.subr.mxu0 0.0
          %980 = vmatpush2.msra.mxu0 0.0
          %981 = vmatprep.subr.mxu0 0.0
          %982 = vmatpush2.msra.mxu0 0.0
          %983 = vmatprep.subr.mxu0 0.0
          %984 = vmatpush2.msra.mxu0 0.0
          %985 = vmatprep.subr.mxu0 0.0
          %986 = vmatpush2.msra.mxu0 0.0
          %987 = vmatprep.subr.mxu0 0.0
          %988 = vmatpush2.msra.mxu0 0.0
          %989 = vmatprep.subr.mxu0 0.0
          %990 = vmatpush2.msra.mxu0 0.0
          %991 = vmatprep.subr.mxu0 0.0
          %992 = vmatpush2.msra.mxu0 0.0
          %993 = vmatprep.subr.mxu0 0.0
          %994 = vmatpush2.msra.mxu0 0.0
          %995 = vmatprep.mubr.f32.mxu0 0.0
          %v996 = vand.u32 %v829, 4294901760
          %997 = vmatmul.mubr.f32.gmra.mxu0 %v996
          %v998 = vpop.f32.mrf.mxu0
          %v999 = vadd.f32 %v908, %v998
          %v1000 = vpop.f32.mrf.mxu0
          %1001 = vmatprep.mubr.f32.mxu0 0.0
          %v1002 = vand.u32 %v832, 4294901760
          %1003 = vmatmul.mubr.f32.gmra.mxu0 %v1002
          %v1004 = vpop.f32.mrf.mxu0
          %v1005 = vadd.f32 %v918, %v1004
          %v1006 = vpop.f32.mrf.mxu0
          %1007 = vdwg.mxu0
          %1008 = vmatprep.subr.mxu0 0.0
          %1009 = vmatpush1.msra.mxu0 0.0
          %1010 = vmatprep.subr.mxu0 0.0
          %1011 = vmatpush1.msra.mxu0 0.0
          %1012 = vmatprep.subr.mxu0 0.0
          %1013 = vmatpush1.msra.mxu0 0.0
          %1014 = vmatprep.subr.mxu0 0.0
          %1015 = vmatpush1.msra.mxu0 0.0
          %1016 = vmatprep.subr.mxu0 0.0
          %1017 = vmatpush1.msra.mxu0 0.0
          %1018 = vmatprep.subr.mxu0 0.0
          %1019 = vmatpush1.msra.mxu0 0.0
          %1020 = vmatprep.subr.mxu0 0.0
          %1021 = vmatpush1.msra.mxu0 0.0
          %1022 = vmatprep.subr.mxu0 0.0
          %1023 = vmatpush1.msra.mxu0 0.0
          %1024 = vmatprep.subr.mxu0 0.0
          %1025 = vmatpush1.msra.mxu0 0.0
          %1026 = vmatprep.subr.mxu0 0.0
          %1027 = vmatpush1.msra.mxu0 0.0
          %1028 = vmatprep.subr.mxu0 0.0
          %1029 = vmatpush1.msra.mxu0 0.0
          %1030 = vmatprep.subr.mxu0 0.0
          %1031 = vmatpush1.msra.mxu0 0.0
          %1032 = vmatprep.subr.mxu0 0.0
          %1033 = vmatpush1.msra.mxu0 0.0
          %1034 = vmatprep.subr.mxu0 0.0
          %1035 = vmatpush1.msra.mxu0 0.0
          %1036 = vmatprep.subr.mxu0 0.0
          %v1037 = vand.u32 %v315, 4294901760
          %v1038 = vsub.f32 %v315, %v1037
          %1039 = vmatpush1.msra.mxu0 %v1038
          %1040 = vmatprep.subr.mxu0 0.0
          %v1041 = vand.u32 %v314, 4294901760
          %v1042 = vsub.f32 %v314, %v1041
          %1043 = vmatpush1.msra.mxu0 %v1042
          %1044 = vmatprep.subr.mxu0 0.0
          %1045 = vmatpush2.msra.mxu0 0.0
          %1046 = vmatprep.subr.mxu0 0.0
          %1047 = vmatpush2.msra.mxu0 0.0
          %1048 = vmatprep.subr.mxu0 0.0
          %1049 = vmatpush2.msra.mxu0 0.0
          %1050 = vmatprep.subr.mxu0 0.0
          %1051 = vmatpush2.msra.mxu0 0.0
          %1052 = vmatprep.subr.mxu0 0.0
          %1053 = vmatpush2.msra.mxu0 0.0
          %1054 = vmatprep.subr.mxu0 0.0
          %1055 = vmatpush2.msra.mxu0 0.0
          %1056 = vmatprep.subr.mxu0 0.0
          %1057 = vmatpush2.msra.mxu0 0.0
          %1058 = vmatprep.subr.mxu0 0.0
          %1059 = vmatpush2.msra.mxu0 0.0
          %1060 = vmatprep.subr.mxu0 0.0
          %1061 = vmatpush2.msra.mxu0 0.0
          %1062 = vmatprep.subr.mxu0 0.0
          %1063 = vmatpush2.msra.mxu0 0.0
          %1064 = vmatprep.subr.mxu0 0.0
          %1065 = vmatpush2.msra.mxu0 0.0
          %1066 = vmatprep.subr.mxu0 0.0
          %1067 = vmatpush2.msra.mxu0 0.0
          %1068 = vmatprep.subr.mxu0 0.0
          %1069 = vmatpush2.msra.mxu0 0.0
          %1070 = vmatprep.subr.mxu0 0.0
          %1071 = vmatpush2.msra.mxu0 0.0
          %1072 = vmatprep.subr.mxu0 0.0
          %1073 = vmatpush2.msra.mxu0 0.0
          %1074 = vmatprep.subr.mxu0 0.0
          %1075 = vmatpush2.msra.mxu0 0.0
          %1076 = vmatprep.mubr.f32.mxu0 0.0
          %v1077 = vand.u32 %v829, 4294901760
          %v1078 = vsub.f32 %v829, %v1077
          %1079 = vmatmul.mubr.f32.gmra.mxu0 %v1078
          %v1080 = vpop.f32.mrf.mxu0
          %v1081 = vadd.f32 %v999, %v1080
          %v1082 = vpop.f32.mrf.mxu0
          %1083 = vmatprep.mubr.f32.mxu0 0.0
          %v1084 = vand.u32 %v832, 4294901760
          %v1085 = vsub.f32 %v832, %v1084
          %1086 = vmatmul.mubr.f32.gmra.mxu0 %v1085
          %v1087 = vpop.f32.mrf.mxu0
          %v1088 = vadd.f32 %v1005, %v1087
          %v1089 = vpop.f32.mrf.mxu0
          %1090 = vdwg.mxu0
          %1091 = vmatprep.subr.mxu0 0.0
          %1092 = vmatpush1.msra.mxu0 0.0
          %1093 = vmatprep.subr.mxu0 0.0
          %1094 = vmatpush1.msra.mxu0 0.0
          %1095 = vmatprep.subr.mxu0 0.0
          %1096 = vmatpush1.msra.mxu0 0.0
          %1097 = vmatprep.subr.mxu0 0.0
          %1098 = vmatpush1.msra.mxu0 0.0
          %1099 = vmatprep.subr.mxu0 0.0
          %1100 = vmatpush1.msra.mxu0 0.0
          %1101 = vmatprep.subr.mxu0 0.0
          %1102 = vmatpush1.msra.mxu0 0.0
          %1103 = vmatprep.subr.mxu0 0.0
          %1104 = vmatpush1.msra.mxu0 0.0
          %1105 = vmatprep.subr.mxu0 0.0
          %1106 = vmatpush1.msra.mxu0 0.0
          %1107 = vmatprep.subr.mxu0 0.0
          %1108 = vmatpush1.msra.mxu0 0.0
          %1109 = vmatprep.subr.mxu0 0.0
          %1110 = vmatpush1.msra.mxu0 0.0
          %1111 = vmatprep.subr.mxu0 0.0
          %1112 = vmatpush1.msra.mxu0 0.0
          %1113 = vmatprep.subr.mxu0 0.0
          %1114 = vmatpush1.msra.mxu0 0.0
          %1115 = vmatprep.subr.mxu0 0.0
          %1116 = vmatpush1.msra.mxu0 0.0
          %1117 = vmatprep.subr.mxu0 0.0
          %1118 = vmatpush1.msra.mxu0 0.0
          %1119 = vmatprep.subr.mxu0 0.0
          %v1120 = vand.u32 %v315, 4294901760
          %1121 = vmatpush1.msra.mxu0 %v1120
          %1122 = vmatprep.subr.mxu0 0.0
          %v1123 = vand.u32 %v314, 4294901760
          %1124 = vmatpush1.msra.mxu0 %v1123
          %1125 = vmatprep.subr.mxu0 0.0
          %1126 = vmatpush2.msra.mxu0 0.0
          %1127 = vmatprep.subr.mxu0 0.0
          %1128 = vmatpush2.msra.mxu0 0.0
          %1129 = vmatprep.subr.mxu0 0.0
          %1130 = vmatpush2.msra.mxu0 0.0
          %1131 = vmatprep.subr.mxu0 0.0
          %1132 = vmatpush2.msra.mxu0 0.0
          %1133 = vmatprep.subr.mxu0 0.0
          %1134 = vmatpush2.msra.mxu0 0.0
          %1135 = vmatprep.subr.mxu0 0.0
          %1136 = vmatpush2.msra.mxu0 0.0
          %1137 = vmatprep.subr.mxu0 0.0
          %1138 = vmatpush2.msra.mxu0 0.0
          %1139 = vmatprep.subr.mxu0 0.0
          %1140 = vmatpush2.msra.mxu0 0.0
          %1141 = vmatprep.subr.mxu0 0.0
          %1142 = vmatpush2.msra.mxu0 0.0
          %1143 = vmatprep.subr.mxu0 0.0
          %1144 = vmatpush2.msra.mxu0 0.0
          %1145 = vmatprep.subr.mxu0 0.0
          %1146 = vmatpush2.msra.mxu0 0.0
          %1147 = vmatprep.subr.mxu0 0.0
          %1148 = vmatpush2.msra.mxu0 0.0
          %1149 = vmatprep.subr.mxu0 0.0
          %1150 = vmatpush2.msra.mxu0 0.0
          %1151 = vmatprep.subr.mxu0 0.0
          %1152 = vmatpush2.msra.mxu0 0.0
          %1153 = vmatprep.subr.mxu0 0.0
          %1154 = vmatpush2.msra.mxu0 0.0
          %1155 = vmatprep.subr.mxu0 0.0
          %1156 = vmatpush2.msra.mxu0 0.0
          %1157 = vmatprep.mubr.f32.mxu0 0.0
          %v1158 = vand.u32 %v829, 4294901760
          %v1159 = vsub.f32 %v829, %v1158
          %v1160 = vand.u32 %v1159, 4294901760
          %1161 = vmatmul.mubr.f32.gmra.mxu0 %v1160
          %v1162 = vpop.f32.mrf.mxu0
          %v1163 = vadd.f32 %v1081, %v1162
          %v1164 = vpop.f32.mrf.mxu0
          %1165 = vmatprep.mubr.f32.mxu0 0.0
          %v1166 = vand.u32 %v832, 4294901760
          %v1167 = vsub.f32 %v832, %v1166
          %v1168 = vand.u32 %v1167, 4294901760
          %1169 = vmatmul.mubr.f32.gmra.mxu0 %v1168
          %v1170 = vpop.f32.mrf.mxu0
          %v1171 = vadd.f32 %v1088, %v1170
          %v1172 = vpop.f32.mrf.mxu0
          %1173 = vdwg.mxu0
          %1174 = vmatprep.subr.mxu0 0.0
          %1175 = vmatpush1.msra.mxu0 0.0
          %1176 = vmatprep.subr.mxu0 0.0
          %1177 = vmatpush1.msra.mxu0 0.0
          %1178 = vmatprep.subr.mxu0 0.0
          %1179 = vmatpush1.msra.mxu0 0.0
          %1180 = vmatprep.subr.mxu0 0.0
          %1181 = vmatpush1.msra.mxu0 0.0
          %1182 = vmatprep.subr.mxu0 0.0
          %1183 = vmatpush1.msra.mxu0 0.0
          %1184 = vmatprep.subr.mxu0 0.0
          %1185 = vmatpush1.msra.mxu0 0.0
          %1186 = vmatprep.subr.mxu0 0.0
          %1187 = vmatpush1.msra.mxu0 0.0
          %1188 = vmatprep.subr.mxu0 0.0
          %1189 = vmatpush1.msra.mxu0 0.0
          %1190 = vmatprep.subr.mxu0 0.0
          %1191 = vmatpush1.msra.mxu0 0.0
          %1192 = vmatprep.subr.mxu0 0.0
          %1193 = vmatpush1.msra.mxu0 0.0
          %1194 = vmatprep.subr.mxu0 0.0
          %1195 = vmatpush1.msra.mxu0 0.0
          %1196 = vmatprep.subr.mxu0 0.0
          %1197 = vmatpush1.msra.mxu0 0.0
          %1198 = vmatprep.subr.mxu0 0.0
          %1199 = vmatpush1.msra.mxu0 0.0
          %1200 = vmatprep.subr.mxu0 0.0
          %1201 = vmatpush1.msra.mxu0 0.0
          %1202 = vmatprep.subr.mxu0 0.0
          %v1203 = vand.u32 %v315, 4294901760
          %v1204 = vsub.f32 %v315, %v1203
          %v1205 = vand.u32 %v1204, 4294901760
          %1206 = vmatpush1.msra.mxu0 %v1205
          %1207 = vmatprep.subr.mxu0 0.0
          %v1208 = vand.u32 %v314, 4294901760
          %v1209 = vsub.f32 %v314, %v1208
          %v1210 = vand.u32 %v1209, 4294901760
          %1211 = vmatpush1.msra.mxu0 %v1210
          %1212 = vmatprep.subr.mxu0 0.0
          %1213 = vmatpush2.msra.mxu0 0.0
          %1214 = vmatprep.subr.mxu0 0.0
          %1215 = vmatpush2.msra.mxu0 0.0
          %1216 = vmatprep.subr.mxu0 0.0
          %1217 = vmatpush2.msra.mxu0 0.0
          %1218 = vmatprep.subr.mxu0 0.0
          %1219 = vmatpush2.msra.mxu0 0.0
          %1220 = vmatprep.subr.mxu0 0.0
          %1221 = vmatpush2.msra.mxu0 0.0
          %1222 = vmatprep.subr.mxu0 0.0
          %1223 = vmatpush2.msra.mxu0 0.0
          %1224 = vmatprep.subr.mxu0 0.0
          %1225 = vmatpush2.msra.mxu0 0.0
          %1226 = vmatprep.subr.mxu0 0.0
          %1227 = vmatpush2.msra.mxu0 0.0
          %1228 = vmatprep.subr.mxu0 0.0
          %1229 = vmatpush2.msra.mxu0 0.0
          %1230 = vmatprep.subr.mxu0 0.0
          %1231 = vmatpush2.msra.mxu0 0.0
          %1232 = vmatprep.subr.mxu0 0.0
          %1233 = vmatpush2.msra.mxu0 0.0
          %1234 = vmatprep.subr.mxu0 0.0
          %1235 = vmatpush2.msra.mxu0 0.0
          %1236 = vmatprep.subr.mxu0 0.0
          %1237 = vmatpush2.msra.mxu0 0.0
          %1238 = vmatprep.subr.mxu0 0.0
          %1239 = vmatpush2.msra.mxu0 0.0
          %1240 = vmatprep.subr.mxu0 0.0
          %1241 = vmatpush2.msra.mxu0 0.0
          %1242 = vmatprep.subr.mxu0 0.0
          %1243 = vmatpush2.msra.mxu0 0.0
          %1244 = vmatprep.mubr.f32.mxu0 0.0
          %v1245 = vand.u32 %v829, 4294901760
          %1246 = vmatmul.mubr.f32.gmra.mxu0 %v1245
          %v1247 = vpop.f32.mrf.mxu0
          %v1248 = vadd.f32 %v1163, %v1247
          %v1249 = vpop.f32.mrf.mxu0
          %1250 = vmatprep.mubr.f32.mxu0 0.0
          %v1251 = vand.u32 %v832, 4294901760
          %1252 = vmatmul.mubr.f32.gmra.mxu0 %v1251
          %v1253 = vpop.f32.mrf.mxu0
          %v1254 = vadd.f32 %v1171, %v1253
          %v1255 = vpop.f32.mrf.mxu0
          %1256 = vdwg.mxu0
          %1257 = vmatprep.subr.mxu0 0.0
          %1258 = vmatpush1.msra.mxu0 0.0
          %1259 = vmatprep.subr.mxu0 0.0
          %1260 = vmatpush1.msra.mxu0 0.0
          %1261 = vmatprep.subr.mxu0 0.0
          %1262 = vmatpush1.msra.mxu0 0.0
          %1263 = vmatprep.subr.mxu0 0.0
          %1264 = vmatpush1.msra.mxu0 0.0
          %1265 = vmatprep.subr.mxu0 0.0
          %1266 = vmatpush1.msra.mxu0 0.0
          %1267 = vmatprep.subr.mxu0 0.0
          %1268 = vmatpush1.msra.mxu0 0.0
          %1269 = vmatprep.subr.mxu0 0.0
          %1270 = vmatpush1.msra.mxu0 0.0
          %1271 = vmatprep.subr.mxu0 0.0
          %1272 = vmatpush1.msra.mxu0 0.0
          %1273 = vmatprep.subr.mxu0 0.0
          %1274 = vmatpush1.msra.mxu0 0.0
          %1275 = vmatprep.subr.mxu0 0.0
          %1276 = vmatpush1.msra.mxu0 0.0
          %1277 = vmatprep.subr.mxu0 0.0
          %1278 = vmatpush1.msra.mxu0 0.0
          %1279 = vmatprep.subr.mxu0 0.0
          %1280 = vmatpush1.msra.mxu0 0.0
          %1281 = vmatprep.subr.mxu0 0.0
          %1282 = vmatpush1.msra.mxu0 0.0
          %1283 = vmatprep.subr.mxu0 0.0
          %1284 = vmatpush1.msra.mxu0 0.0
          %1285 = vmatprep.subr.mxu0 0.0
          %v1286 = vand.u32 %v315, 4294901760
          %1287 = vmatpush1.msra.mxu0 %v1286
          %1288 = vmatprep.subr.mxu0 0.0
          %v1289 = vand.u32 %v314, 4294901760
          %1290 = vmatpush1.msra.mxu0 %v1289
          %1291 = vmatprep.subr.mxu0 0.0
          %1292 = vmatpush2.msra.mxu0 0.0
          %1293 = vmatprep.subr.mxu0 0.0
          %1294 = vmatpush2.msra.mxu0 0.0
          %1295 = vmatprep.subr.mxu0 0.0
          %1296 = vmatpush2.msra.mxu0 0.0
          %1297 = vmatprep.subr.mxu0 0.0
          %1298 = vmatpush2.msra.mxu0 0.0
          %1299 = vmatprep.subr.mxu0 0.0
          %1300 = vmatpush2.msra.mxu0 0.0
          %1301 = vmatprep.subr.mxu0 0.0
          %1302 = vmatpush2.msra.mxu0 0.0
          %1303 = vmatprep.subr.mxu0 0.0
          %1304 = vmatpush2.msra.mxu0 0.0
          %1305 = vmatprep.subr.mxu0 0.0
          %1306 = vmatpush2.msra.mxu0 0.0
          %1307 = vmatprep.subr.mxu0 0.0
          %1308 = vmatpush2.msra.mxu0 0.0
          %1309 = vmatprep.subr.mxu0 0.0
          %1310 = vmatpush2.msra.mxu0 0.0
          %1311 = vmatprep.subr.mxu0 0.0
          %1312 = vmatpush2.msra.mxu0 0.0
          %1313 = vmatprep.subr.mxu0 0.0
          %1314 = vmatpush2.msra.mxu0 0.0
          %1315 = vmatprep.subr.mxu0 0.0
          %1316 = vmatpush2.msra.mxu0 0.0
          %1317 = vmatprep.subr.mxu0 0.0
          %1318 = vmatpush2.msra.mxu0 0.0
          %1319 = vmatprep.subr.mxu0 0.0
          %1320 = vmatpush2.msra.mxu0 0.0
          %1321 = vmatprep.subr.mxu0 0.0
          %1322 = vmatpush2.msra.mxu0 0.0
          %1323 = vmatprep.mubr.f32.mxu0 0.0
          %v1324 = vand.u32 %v829, 4294901760
          %1325 = vmatmul.mubr.f32.gmra.mxu0 %v1324
          %v1326 = vpop.f32.mrf.mxu0
          %v1327 = vadd.f32 %v1248, %v1326
          %v1328 = vpop.f32.mrf.mxu0
          %1329 = vmatprep.mubr.f32.mxu0 0.0
          %v1330 = vand.u32 %v832, 4294901760
          %1331 = vmatmul.mubr.f32.gmra.mxu0 %v1330
          %v1332 = vpop.f32.mrf.mxu0
          %v1333 = vadd.f32 %v1254, %v1332
          %v1334 = vpop.f32.mrf.mxu0
          %1335 = vdwg.mxu0
          %v1336 = vxor.u32 %v1327, 2147483648
          %v1337 = vxor.u32 %v1333, 2147483648
          %v1338 = vmul.f32 %v1336, 1.442695
          %v1339 = vpow.pop %v1338
          %v1340 = vmul.f32 %v1337, 1.442695
          %v1341 = vpow.pop %v1340
          %v1342 = vadd.f32 %v1339, 1.0
          %v1343 = vadd.f32 %v1341, 1.0
          %v1344 = vrcp.pop %v1342
          %v1345 = vmul.f32 1.0, %v1344
          %v1346 = vrcp.pop %v1343
          %v1347 = vmul.f32 1.0, %v1346
          %1348 = vst.msk [vmem:[%s247] sm:$0xff] %vm270, %v1345
          %1349 = vst.msk [vmem:[%s247 + $0x8] sm:$0xff] %vm270, %v1347
        $region52: #{tpu_custom_call.1} parent=31 // pred_fallthru
          _
        %s1350 = sand.u32 %s122, 1
        %s1351 = scalar_lea.sflag [#allocation6], %s1350
        %s1352 = sand.u32 %s122, 1
        %s1353 = smul.addr %s1352, 16
        %s1354 = scalar_lea.vmem [#allocation10], %s1353
        // Predicated region
        $region53: #{tpu_custom_call.1} parent=31 // pred_check
          %p1355 = pneg %p132
        $region54: #{tpu_custom_call.1} parent=31 // pred_check_branch
          %1357 = sbr.rel (%p1355) target = $region56
        $region55: #{tpu_custom_call.1} parent=31 // pred_region
          %s1358 = smul.u32 2, %s27
          %s1360 = ssub.s32 256, 256
          %1361 = vsyncadd %s1351, %s1360
          %s1362 = smul.addr %s26, 2
          %s1363 = sadd.s32 %s1358, %s1362
          %s1364 = smul.addr %s1363, 128
          %s1365 = scalar_lea.hbm %s3, %s1364
          %s1366 = sshll.u32 %s1354, 4
          %s1367 = int_to_ptr.vmem [resolvable:$true] %s1366
          %1372 = dma.vmem_to_hbm [thread:$0]  %s1367, 256, %s1365, %s1351, 128, 128, 8
        $region56: #{tpu_custom_call.1} parent=31 // pred_fallthru
          _
      $region32: #{tpu_custom_call.1} parent=5 // pred_fallthru
        _
      %p1373 = scmp.le.s32.totalorder 2, %s16
      // Predicated region
      $region57: #{tpu_custom_call.1} parent=5 // pred_check
        %p1374 = pneg %p1373
      $region58: #{tpu_custom_call.1} parent=5 // pred_check_branch
        %1376 = sbr.rel (%p1374) target = $region60
      $region59: #{tpu_custom_call.1} parent=5 // pred_region
        %s1377 = ssub.s32 %s16, 2
        // Predicated region
        $region61: #{tpu_custom_call.1} parent=59 // pred_check
          %p1378 = pneg %p138
        $region62: #{tpu_custom_call.1} parent=59 // pred_check_branch
          %1380 = sbr.rel (%p1378) target = $region64
        $region63: #{tpu_custom_call.1} parent=59 // pred_region
          %s1381 = sand.u32 %s123, 1
          %s1382 = scalar_lea.sflag [#allocation6], %s1381
          %s1383 = sand.u32 %s123, 1
          %s1384 = smul.addr %s1383, 16
          %s1385 = scalar_lea.vmem [#allocation10], %s1384
          %1386 = dma.done %s1382, 256
        $region64: #{tpu_custom_call.1} parent=59 // pred_fallthru
          _
      $region60: #{tpu_custom_call.1} parent=5 // pred_fallthru
        _
    $region6: #{tpu_custom_call.1} parent=1 // loop_footer
      %s20 = sadd.s32 1, %s16
    $region7: #{tpu_custom_call.1} parent=1 // loop_footer_branch
      %15 = sbr.rel target = $region3
    $region8: #{tpu_custom_call.1} parent=1 // loop_exit
      _
    %1387 = vsyncpa [#allocation5], 1
    %s1388 = scalar_lea.sflag [#allocation5], 1
    %1389 = vsyncpa %s1388, 1
    %1390 = vsyncpa [#allocation8], 1
    %1391 = vsyncpa [#allocation6], 1
    %s1392 = scalar_lea.sflag [#allocation6], 1
    %1393 = vsyncpa %s1392, 1

</llo_original>
